<compile_context>
chip_gen: v5e
topology: v5e:2x2
jax: 0.10.0
libtpu: 0.0.40
codegen_flags: <defaults>
</compile_context>

<pallas_src>
import jax
import jax.numpy as jnp
from jax.experimental import pallas as pl
from jax.experimental.pallas import tpu as pltpu


def _round_up(x, m):
    return (x + m - 1) // m * m


# ---------------------------------------------------------------------------
# Pallas kernel: one V-tile of  (control_points + deform)^T @ deform_matrix^T
# ---------------------------------------------------------------------------
def _deform_kernel(s_ref, dt_ref, out_ref):
    # s_ref  : [M_pad, P]   (control_points + deform)^T, batch-folded, row-padded
    # dt_ref : [P, TV]      tile of deform_matrix^T  (V on the 128-lane axis)
    # out_ref: [M_pad, TV]  lane-dense f32 output tile
    out_ref[...] = jnp.dot(
        s_ref[...], dt_ref[...], preferred_element_type=jnp.float32
    )


def _pick_v_tile(v, max_tile=16384):
    """Multiple-of-128 tile for the mesh axis V.

    Guarantees >= 2 grid steps whenever V allows it (so the "parallel" grid
    axis actually shards across v7x's two TensorCores) and nudges the tile
    down to an even step count when that is cheap.
    """
    v128 = _round_up(v, 128)
    if v128 <= 128:
        return 128
    tv = min(max_tile, max(128, ((v128 // 2) // 128) * 128))
    n = -(-v128 // tv)
    while tv > 128 and n % 2 == 1:
        tv -= 128
        n = -(-v128 // tv)
    return tv


# ---------------------------------------------------------------------------
# Module wrapper: constants pre-laid-out once, in the layout the kernel wants.
# ---------------------------------------------------------------------------
def make_simple_vertex(deform_matrix, control_points, *,
                       matmul_dtype=jnp.bfloat16, v_tile=None,
                       vert_layout="BV3"):
    """Build SimpleVertex.forward with the module constants pre-laid-out.

    deform_matrix : [V, P]   (control-point displacements -> mesh vertices)
    control_points: [P, 3]
    matmul_dtype  : dtype for the MXU operands (bf16 default; f32 for exactness)
    vert_layout   : "BV3" (PyTorch semantics, [B,V,3]) or "B3V" (skip transpose)
    Returns forward(param, target) -> (target, deformed_vert f32).
    """
    V, P = deform_matrix.shape
    assert control_points.shape == (P, 3)

    tv = _pick_v_tile(V) if v_tile is None else v_tile
    assert tv % 128 == 0, "V tile must be a multiple of 128"
    n_tiles = pl.cdiv(V, tv)
    v_pad = n_tiles * tv

    # Module constants, laid out once:
    #   dt  : [P, V_pad]  deform_matrix^T, zero-padded on V, streamed as bf16.
    #   cp_t: [3, P]      control_points^T (folded into the small operand).
    dt = jnp.zeros((P, v_pad), matmul_dtype).at[:, :V].set(
        jnp.asarray(deform_matrix, jnp.float32).T.astype(matmul_dtype))
    cp_t = jnp.asarray(control_points, jnp.float32).T          # [3, P]

    def forward(param, target):
        B = target.shape[0]
        M = B * 3
        m_pad = _round_up(M, 8)

        # Tiny layout plumbing on the small operand (fused by XLA):
        # [B, 3P] (or [B,P,3]) -> [B, 3, P] -> + cp^T -> [M, P] -> pad rows to 8k.
        deform_t = param.reshape(B, P, 3).astype(jnp.float32).transpose(0, 2, 1)
        s_t = (deform_t + cp_t[None]).reshape(M, P)
        s_t = jnp.zeros((m_pad, P), matmul_dtype).at[:M].set(
            s_t.astype(matmul_dtype))

        out_t = pl.pallas_call(
            _deform_kernel,
            out_shape=jax.ShapeDtypeStruct((m_pad, v_pad), jnp.float32),
            grid_spec=pltpu.PrefetchScalarGridSpec(
                num_scalar_prefetch=0,
                grid=(n_tiles,),
                in_specs=[
                    pl.BlockSpec((m_pad, P), lambda v: (0, 0)),  # small operand, resident
                    pl.BlockSpec((P, tv), lambda v: (0, v)),     # deform_matrix^T tile
                ],
                out_specs=pl.BlockSpec((m_pad, tv), lambda v: (0, v)),
            ),
            compiler_params=pltpu.CompilerParams(
                dimension_semantics=("parallel",),  # V tiles shard across v7x TCs
            ),
        )(s_t, dt)

        out_t = out_t[:M, :V].reshape(B, 3, V)                  # drop padding
        if vert_layout == "B3V":
            return target, out_t
        # PyTorch semantics: [B, V, 3]  (output layout plumbing only).
        return target, out_t.transpose(0, 2, 1)

    return forward


# ---------------------------------------------------------------------------
# Pure-JAX reference (mirrors the PyTorch module) for verification.
# ---------------------------------------------------------------------------
def _reference(param, target, deform_matrix, control_points):
    B = target.shape[0]
    P = control_points.shape[0]
    deform = param.reshape(B, P, 3).astype(jnp.float32)
    s = control_points[None].astype(jnp.float32) + deform
    deformed = jnp.einsum(
        "vp,bpc->bvc", deform_matrix.astype(jnp.float32), s, precision="highest"
    )
    return target, deformed.astype(jnp.float32)


if __name__ == "__main__":
    key = jax.random.PRNGKey(0)
    kd, kc, kp, kt = jax.random.split(key, 4)

    B = 2            # batch
    P = 24           # cp_num // 3 control points  (cp_num = 72)
    V = 300          # mesh vertices (NOT a multiple of 128 -> exercises padding)

    # Values on a 1/4 grid are exactly representable in bf16 and all partial
    # products/sums are exact in f32, so bf16 MXU inputs give exact results
    # and we can assert tightly.
    def grid_vals(k, shape):
        return jax.random.randint(k, shape, -8, 9).astype(jnp.float32) / 4.0

    deform_matrix = grid_vals(kd, (V, P))
    control_points = grid_vals(kc, (P, 3))
    param = grid_vals(kp, (B, 3 * P))               # flat, like PyTorch .view()
    target = jax.random.normal(kt, (B, V, 3), dtype=jnp.float32)

    forward = jax.jit(make_simple_vertex(deform_matrix, control_points))
    tgt_out, deformed = forward(param, target)
    deformed = jax.block_until_ready(deformed)

    ref_tgt, ref_def = _reference(param, target, deform_matrix, control_points)
    assert tgt_out.shape == target.shape and bool(jnp.array_equal(tgt_out, target))
    assert deformed.shape == (B, V, 3) and deformed.dtype == jnp.float32
    assert bool(jnp.allclose(deformed, ref_def, rtol=1e-5, atol=1e-5)), (
        float(jnp.max(jnp.abs(deformed - ref_def)))
    )
    print("KERNEL_OK")
</pallas_src>

<mosaic_0001>
module attributes {stable_mosaic.version = 11 : i64} {
  func.func @_deform_kernel(%arg0: i32, %arg1: memref<8x24xbf16, #tpu.memory_space<vmem>>, %arg2: memref<24x128xbf16, #tpu.memory_space<vmem>>, %arg3: memref<8x128xf32, #tpu.memory_space<vmem>>) attributes {dimension_semantics = [#tpu.dimension_semantics<parallel>], iteration_bounds = array<i64: 3>, scalar_prefetch = 0 : i64, scratch_operands = 0 : i64, tpu.core_type = #tpu.core_type<tc>, window_params = [{pipeline_mode = #tpu.pipeline_mode<synchronous>, transform_indices = @transform_0, window_bounds = array<i64: 8, 24>}, {transform_indices = @transform_1, window_bounds = array<i64: 24, 128>}, {transform_indices = @transform_2, window_bounds = array<i64: 8, 128>}]} {
    %c0 = arith.constant 0 : index
    %c0_0 = arith.constant 0 : index
    %0 = vector.load %arg1[%c0, %c0_0] : memref<8x24xbf16, #tpu.memory_space<vmem>>, vector<8x24xbf16>
    %c0_1 = arith.constant 0 : index
    %c0_2 = arith.constant 0 : index
    %1 = vector.load %arg2[%c0_1, %c0_2] : memref<24x128xbf16, #tpu.memory_space<vmem>>, vector<24x128xbf16>
    %cst = arith.constant dense<0.000000e+00> : vector<8x128xf32>
    %2 = tpu.matmul %0, %1, %cst {dimension_numbers = #tpu.dot_dimension_numbers<[1], [0], [0], [1], [0, 0, 1, 1], [], []>} : vector<8x24xbf16>, vector<24x128xbf16>, vector<8x128xf32> -> vector<8x128xf32>
    %c0_3 = arith.constant 0 : index
    %c0_4 = arith.constant 0 : index
    %3 = vector.load %arg3[%c0_3, %c0_4] : memref<8x128xf32, #tpu.memory_space<vmem>>, vector<8x128xf32>
    tpu.vector_store %arg3[%c0_3, %c0_4], %2 {strides = array<i32>} : memref<8x128xf32, #tpu.memory_space<vmem>>, vector<8x128xf32>,
    return
  }
  func.func @transform_0(%arg0: i32) -> (i32, i32) {
    %c0_i32 = arith.constant 0 : i32
    %c0_i32_0 = arith.constant 0 : i32
    %c0_i32_1 = arith.constant 0 : i32
    return %c0_i32, %c0_i32_0 : i32, i32
  }
  func.func @transform_1(%arg0: i32) -> (i32, i32) {
    %c0_i32 = arith.constant 0 : i32
    %c0_i32_0 = arith.constant 0 : i32
    return %c0_i32, %arg0 : i32, i32
  }
  func.func @transform_2(%arg0: i32) -> (i32, i32) {
    %c0_i32 = arith.constant 0 : i32
    %c0_i32_0 = arith.constant 0 : i32
    return %c0_i32, %arg0 : i32, i32
  }
}

</mosaic_0001>

<llo_original>
// kernel: forward.1
$region0: #{forward.1}
  #allocation0 [shape = 'u32[]', space=smem, size = 0x4, offset = 0x4, fixed_abs, tag = 'smem constant byte address 0x4 - core index']
  #allocation1 [shape = 'u32[72,128]{1,0:T(1,128)}', space=vmem, size = 0x9000, scoped, tag = 'internal scratch']
  %s0 = inlined_call_operand.vmem [shape: bf16[8,24], index: 0, kind: input, shape index: {}]
  %s1 = inlined_call_operand.vmem [shape: bf16[24,384], index: 1, kind: input, shape index: {}]
  %s2 = inlined_call_operand.vmem [shape: f32[8,384], index: 2, kind: output, shape index: {}]
  %s3 = sld [smem:[#allocation0]]
  $region82: #{forward.1} parent=0
    _
  %s5 = ssub.s32 1, %s3
  %s6 = scalar_select 0, %s5, %s3
  $region1: #{forward.1} parent=0
    #allocation2 [shape = 'u8[12288]{0}', space=vmem, size = 0x3000, scoped, tag = 'input window, operand 1']
    loop: start=0, step=1, limit=5
    $region2: #{forward.1} parent=1 // loop_pre_header
      _
    $region3: #{forward.1} parent=1 // loop_header
      %s8 = sphi 0, %s12
      %p9 = scmp.ge.s32.totalorder %s8, 5
      %s16 = sphi 0, %s16
      %s18 = sphi 0, %s16
      %s19 = sphi 0, %s18
      %s33 = sphi 0, %s19
      %s39 = sphi 0, %s41
      %s42 = sphi 0, %s39
      %s43 = sphi 0, %s42
      %s59 = sphi 0, %s43
      %s65 = sphi 0, %s67
      %s68 = sphi 0, %s65
      %s69 = sphi 0, %s68
      %s85 = sphi 0, %s69
    $region4: #{forward.1} parent=1 // loop_header_branch
      %11 = sbr.rel (%p9) target = $region8
    $region5: #{forward.1} parent=1 // loop_body
      %s13 = ssub.s32 %s8, 1
      %s14 = ssub.s32 %s8, 2
      %s15 = sadd.s32 %s8, 1
      %s17 = sadd.s32 %s16, 1
      %p20 = scmp.eq.s32.totalorder %s8, 2
      %p21 = scmp.ne.s32.totalorder %s16, %s18
      %p22 = scmp.eq.s32.totalorder %s8, 0
      %p23 = por %p21, %p22
      %p24 = scmp.ne.s32.totalorder %s16, %s18
      %p25 = scmp.eq.s32.totalorder %s13, 2
      %p26 = por %p24, %p25
      %p27 = scmp.ne.s32.totalorder %s18, %s19
      %p28 = scmp.eq.s32.totalorder %s13, 0
      %p29 = por %p27, %p28
      %p30 = scmp.ne.s32.totalorder %s18, %s19
      %p31 = scmp.eq.s32.totalorder %s14, 2
      %p32 = por %p30, %p31
      %p34 = scmp.ne.s32.totalorder %s19, %s33
      %p35 = scmp.eq.s32.totalorder %s14, 0
      %p36 = por %p34, %p35
      %s37 = ssub.s32 %s8, %s15
      %p38 = scmp.eq.s32.totalorder %s37, 0
      %s40 = sadd.s32 %s39, 1
      %s41 = scalar_select %p38, %s39, %s40
      %p44 = pneg %p38
      %p45 = scmp.eq.s32.totalorder %s8, 2
      %p46 = por %p44, %p45
      %p47 = scmp.ne.s32.totalorder %s39, %s42
      %p48 = scmp.eq.s32.totalorder %s8, 0
      %p49 = por %p47, %p48
      %p50 = scmp.ne.s32.totalorder %s39, %s42
      %p51 = scmp.eq.s32.totalorder %s13, 2
      %p52 = por %p50, %p51
      %p53 = scmp.ne.s32.totalorder %s42, %s43
      %p54 = scmp.eq.s32.totalorder %s13, 0
      %p55 = por %p53, %p54
      %p56 = scmp.ne.s32.totalorder %s42, %s43
      %p57 = scmp.eq.s32.totalorder %s14, 2
      %p58 = por %p56, %p57
      %p60 = scmp.ne.s32.totalorder %s43, %s59
      %p61 = scmp.eq.s32.totalorder %s14, 0
      %p62 = por %p60, %p61
      %s63 = ssub.s32 %s8, %s15
      %p64 = scmp.eq.s32.totalorder %s63, 0
      %s66 = sadd.s32 %s65, 1
      %s67 = scalar_select %p64, %s65, %s66
      %p70 = pneg %p64
      %p71 = scmp.eq.s32.totalorder %s8, 2
      %p72 = por %p70, %p71
      %p73 = scmp.ne.s32.totalorder %s65, %s68
      %p74 = scmp.eq.s32.totalorder %s8, 0
      %p75 = por %p73, %p74
      %p76 = scmp.ne.s32.totalorder %s65, %s68
      %p77 = scmp.eq.s32.totalorder %s13, 2
      %p78 = por %p76, %p77
      %p79 = scmp.ne.s32.totalorder %s68, %s69
      %p80 = scmp.eq.s32.totalorder %s13, 0
      %p81 = por %p79, %p80
      %p82 = scmp.ne.s32.totalorder %s68, %s69
      %p83 = scmp.eq.s32.totalorder %s14, 2
      %p84 = por %p82, %p83
      %p86 = scmp.ne.s32.totalorder %s69, %s85
      %p87 = scmp.eq.s32.totalorder %s14, 0
      %p88 = por %p86, %p87
      %p89 = scmp.le.s32.totalorder 1, %s8
      %p90 = scmp.lt.s32.totalorder %s8, 4
      %p91 = pnand %p89, %p90
      %p92 = pneg %p91
      // Predicated region
      $region9: #{forward.1} parent=5 // pred_check
        _
      $region10: #{forward.1} parent=5 // pred_check_branch
        %94 = sbr.rel (%p91) target = $region12
      $region11: #{forward.1} parent=5 // pred_region
        %s95 = ssub.s32 %s8, 1
        // Predicated region
        $region13: #{forward.1} parent=11 // pred_check
          %p96 = pneg %p29
        $region14: #{forward.1} parent=11 // pred_check_branch
          %98 = sbr.rel (%p96) target = $region16
        $region15: #{forward.1} parent=11 // pred_region
          _
        $region16: #{forward.1} parent=11 // pred_fallthru
          _
      $region12: #{forward.1} parent=5 // pred_fallthru
        _
      %p99 = scmp.lt.s32.totalorder %s8, 3
      // Predicated region
      $region17: #{forward.1} parent=5 // pred_check
        %p100 = pneg %p99
      $region18: #{forward.1} parent=5 // pred_check_branch
        %102 = sbr.rel (%p100) target = $region20
      $region19: #{forward.1} parent=5 // pred_region
        // Predicated region
        $region21: #{forward.1} parent=19 // pred_check
          %p103 = pneg %p49
        $region22: #{forward.1} parent=19 // pred_check_branch
          %105 = sbr.rel (%p103) target = $region24
        $region23: #{forward.1} parent=19 // pred_region
          %s106 = sand.u32 %s39, 1
          %s107 = sand.u32 %s39, 1
          %s108 = smul.addr %s107, 12
          %s109 = scalar_lea.vmem [#allocation2], %s108
          %s110 = smul.addr %s8, 4
          %s111 = scalar_lea.vmem %s1, %s110
          // Predicated region
          $region25: #{forward.1} parent=23 // pred_check
            _
          $region26: #{forward.1} parent=23 // pred_check_branch
            %113 = sbr.rel (0) target = $region28
          $region27: #{forward.1} parent=23 // pred_region
            // Predicated region
            $region29: #{forward.1} parent=27 // pred_check
              _
            $region30: #{forward.1} parent=27 // pred_check_branch
              %115 = sbr.rel target = $region32
            $region31: #{forward.1} parent=27 // pred_region
              // Predicated region
              $region44: #{forward.1} parent=31 // pred_check
                _
              $region45: #{forward.1} parent=31 // pred_check_branch
                %135 = sbr.rel (0) target = $region47
              $region46: #{forward.1} parent=31 // pred_region
                loop: start=0, step=1, limit=1
                $region48: #{forward.1} parent=46 // loop_pre_header
                  _
                $region49: #{forward.1} parent=46 // loop_header
                  %s137 = sphi 0, %s141
                  %p138 = scmp.ge.s32.totalorder %s137, 1
                  %s142 = sphi %s111, %s111
                  %s143 = sphi %s109, %s109
                $region50: #{forward.1} parent=46 // loop_header_branch
                  %140 = sbr.rel (%p138) target = $region54
                $region51: #{forward.1} parent=46 // loop_body
                  _
                $region52: #{forward.1} parent=46 // loop_footer
                  %s141 = sadd.s32 1, %s137
                $region53: #{forward.1} parent=46 // loop_footer_branch
                  %136 = sbr.rel target = $region49
                $region54: #{forward.1} parent=46 // loop_exit
                  _
                %s145 = ssub.s32 16, 1
                loop: start=0, step=1, limit=1
                $region55: #{forward.1} parent=46 // loop_pre_header
                  _
                $region56: #{forward.1} parent=46 // loop_header
                  %s147 = sphi 0, %s151
                  %p148 = scmp.ge.s32.totalorder %s147, 1
                  %s152 = sphi %s111, %s111
                  %s153 = sphi %s109, %s109
                $region57: #{forward.1} parent=46 // loop_header_branch
                  %150 = sbr.rel (%p148) target = $region61
                $region58: #{forward.1} parent=46 // loop_body
                  %v154 = vld [vmem:[%s152] sm:%s145]
                  %155 = vst [vmem:[%s153] sm:%s145] %v154
                  %v156 = vld [vmem:[%s152 + $0xc] sm:%s145]
                  %157 = vst [vmem:[%s153 + $0x4] sm:%s145] %v156
                  %v158 = vld [vmem:[%s152 + $0x18] sm:%s145]
                  %159 = vst [vmem:[%s153 + $0x8] sm:%s145] %v158
                $region59: #{forward.1} parent=46 // loop_footer
                  %s151 = sadd.s32 1, %s147
                $region60: #{forward.1} parent=46 // loop_footer_branch
                  %146 = sbr.rel target = $region56
                $region61: #{forward.1} parent=46 // loop_exit
                  _
              $region47: #{forward.1} parent=31 // pred_fallthru
                _
            $region32: #{forward.1} parent=27 // pred_fallthru
              _
            // Predicated region
            $region33: #{forward.1} parent=27 // pred_check
              _
            $region34: #{forward.1} parent=27 // pred_check_branch
              %117 = sbr.rel (0) target = $region36
            $region35: #{forward.1} parent=27 // pred_region
              %s119 = ssub.s32 16, 1
              loop: start=0, step=1, limit=1
              $region37: #{forward.1} parent=35 // loop_pre_header
                _
              $region38: #{forward.1} parent=35 // loop_header
                %s121 = sphi 0, %s125
                %p122 = scmp.ge.s32.totalorder %s121, 1
                %s126 = sphi %s111, %s111
                %s127 = sphi %s109, %s109
              $region39: #{forward.1} parent=35 // loop_header_branch
                %124 = sbr.rel (%p122) target = $region43
              $region40: #{forward.1} parent=35 // loop_body
                %v128 = vld [vmem:[%s126] sm:%s119]
                %129 = vst [vmem:[%s127] sm:%s119] %v128
                %v130 = vld [vmem:[%s126 + $0xc] sm:%s119]
                %131 = vst [vmem:[%s127 + $0x4] sm:%s119] %v130
                %v132 = vld [vmem:[%s126 + $0x18] sm:%s119]
                %133 = vst [vmem:[%s127 + $0x8] sm:%s119] %v132
              $region41: #{forward.1} parent=35 // loop_footer
                %s125 = sadd.s32 1, %s121
              $region42: #{forward.1} parent=35 // loop_footer_branch
                %120 = sbr.rel target = $region38
              $region43: #{forward.1} parent=35 // loop_exit
                _
            $region36: #{forward.1} parent=27 // pred_fallthru
              _
          $region28: #{forward.1} parent=23 // pred_fallthru
            _
          %160 = vnop
        $region24: #{forward.1} parent=19 // pred_fallthru
          _
      $region20: #{forward.1} parent=5 // pred_fallthru
        _
      %p161 = scmp.le.s32.totalorder 1, %s8
      %p162 = scmp.lt.s32.totalorder %s8, 4
      %p163 = pnand %p161, %p162
      %p164 = pneg %p163
      // Predicated region
      $region62: #{forward.1} parent=5 // pred_check
        _
      $region63: #{forward.1} parent=5 // pred_check_branch
        %166 = sbr.rel (%p163) target = $region65
      $region64: #{forward.1} parent=5 // pred_region
        %s167 = ssub.s32 %s8, 1
        %s168 = sand.u32 %s42, 1
        %s169 = sand.u32 %s42, 1
        %s170 = smul.addr %s169, 12
        %s171 = scalar_lea.vmem [#allocation2], %s170
        // Predicated region
        $region66: #{forward.1} parent=64 // pred_check
          %p172 = pneg %p55
        $region67: #{forward.1} parent=64 // pred_check_branch
          %174 = sbr.rel (%p172) target = $region69
        $region68: #{forward.1} parent=64 // pred_region
          _
        $region69: #{forward.1} parent=64 // pred_fallthru
          _
        %p175 = pneg %p29
        %p176 = pneg %p26
        %s177 = sand.u32 %s42, 1
        %s178 = sand.u32 %s42, 1
        %s179 = smul.addr %s178, 12
        %s180 = scalar_lea.vmem [#allocation2], %s179
        %p181 = pneg %p55
        %p182 = pneg %p52
        %p183 = pneg %p81
        %p184 = pneg %p78
        %p185 = scmp.lt.s32.totalorder %s13, 2
        %s186 = scalar_select %p185, %s13, 2
        %s187 = smul.addr %s186, 8
        %s188 = scalar_lea.vmem %s2, %s187
        %p189 = scmp.lt.s32.totalorder %s13, 2
        %s190 = scalar_select %p189, %s13, 2
        %s191 = smul.addr %s190, 8
        %s192 = scalar_lea.vmem %s2, %s191
        %v194 = vld [vmem:[%s0] sm:$0xf]
        %v195 = vld [vmem:[%s171] sm:$0xf]
        %v196 = vld [vmem:[%s171 + $0x4] sm:$0xf]
        %v197 = vld [vmem:[%s171 + $0x8] sm:$0xf]
        %v201 = vunpack.c.l.b16 %v195
        %v202 = vunpack.c.l.b16 %v196
        %v203 = vunpack.c.l.b16 %v197
        %v204 = vpack.c.b16 %v202, %v201
        %v205 = vpack.c.b16 %v203, %v203
        %vm207 = vcmask 195584
        %v209 = vsel %vm207, %v194, 0
        %vm211 = vcmask 1043456
        %v213 = vsel %vm211, %v205, 0
        %215 = vmatpush.bf16.msra.mxu0 0
        %216 = vmatpush.bf16.msra.mxu0 0
        %217 = vmatpush.bf16.msra.mxu0 0
        %218 = vmatpush.bf16.msra.mxu0 0
        %219 = vmatpush.bf16.msra.mxu0 0
        %220 = vmatpush.bf16.msra.mxu0 0
        %221 = vmatpush.bf16.msra.mxu0 %v213
        %222 = vmatpush.bf16.msra.mxu0 %v204
        %223 = vmatmul.bf16.gmra.mxu0 %v209
        %v224 = vpop.f32.mrf.mxu0
        %v225 = vadd.f32 0.0, %v224
        %v226 = vpop.f32.mrf.mxu0
        %227 = vdwg.mxu0
        %228 = vst [vmem:[%s192] sm:$0xff] %v225
        %p229 = scmp.lt.s32.totalorder %s13, 2
        %s230 = scalar_select %p229, %s13, 2
        %s231 = smul.addr %s230, 8
        %s232 = scalar_lea.vmem %s2, %s231
        // Predicated region
        $region70: #{forward.1} parent=64 // pred_check
          %p233 = pneg %p78
        $region71: #{forward.1} parent=64 // pred_check_branch
          %235 = sbr.rel (%p233) target = $region73
        $region72: #{forward.1} parent=64 // pred_region
          _
        $region73: #{forward.1} parent=64 // pred_fallthru
          _
      $region65: #{forward.1} parent=5 // pred_fallthru
        _
      %p236 = scmp.le.s32.totalorder 2, %s8
      // Predicated region
      $region74: #{forward.1} parent=5 // pred_check
        %p237 = pneg %p236
      $region75: #{forward.1} parent=5 // pred_check_branch
        %239 = sbr.rel (%p237) target = $region77
      $region76: #{forward.1} parent=5 // pred_region
        %s240 = ssub.s32 %s8, 2
        // Predicated region
        $region78: #{forward.1} parent=76 // pred_check
          %p241 = pneg %p84
        $region79: #{forward.1} parent=76 // pred_check_branch
          %243 = sbr.rel (%p241) target = $region81
        $region80: #{forward.1} parent=76 // pred_region
          %p244 = scmp.lt.s32.totalorder %s14, 2
          %s245 = scalar_select %p244, %s14, 2
          %s246 = smul.addr %s245, 8
          %s247 = scalar_lea.vmem %s2, %s246
        $region81: #{forward.1} parent=76 // pred_fallthru
          _
      $region77: #{forward.1} parent=5 // pred_fallthru
        _
    $region6: #{forward.1} parent=1 // loop_footer
      %s12 = sadd.s32 1, %s8
    $region7: #{forward.1} parent=1 // loop_footer_branch
      %7 = sbr.rel target = $region3
    $region8: #{forward.1} parent=1 // loop_exit
      _

</llo_original>
